<compile_context>
chip_gen: v7x
topology: tpu7x:2x2x1
jax: 0.10.0
libtpu: 0.0.40
codegen_flags: <defaults>
</compile_context>

<pallas_src>
import jax
import jax.numpy as jnp
from jax.experimental import pallas as pl
from jax.experimental.pallas import tpu as pltpu

LANE = 128
SUBLANE = 8

# Target for the total double-buffered VMEM footprint of all streams
# (x + n errors + output, 2 buffers each).  24 MiB is comfortably inside the
# 48 MiB recommended ceiling on v7x (64 MiB physical) and well under the
# 128 MiB on v5e/v6e once the scoped limit is raised.
_VMEM_STREAM_BUDGET_BYTES = 24 * 1024 * 1024
_VMEM_LIMIT_BYTES = 32 * 1024 * 1024


def _make_kernel(n):
    """Builds the weighted-sum kernel for a static number n of error tensors."""

    def kernel(*refs):
        w_ref = refs[0]             # SMEM (n+1,) f32: [wx[t], we[t,0..n-1]]
        x_ref = refs[1]             # VMEM (tile_r, width)
        e_refs = refs[2:2 + n]      # n x VMEM (tile_r, width)
        o_ref = refs[2 + n]         # VMEM (tile_r, width)

        acc = x_ref[...].astype(jnp.float32) * w_ref[0]
        for i, e_ref in enumerate(e_refs):
            acc = acc + e_ref[...].astype(jnp.float32) * w_ref[i + 1]
        o_ref[...] = acc.astype(o_ref.dtype)

    return kernel


def _pick_width(main_elems):
    """Widest lane-dense last dim that divides the bulk element count."""
    for w in (1024, 512, 256, LANE):
        if main_elems % w == 0:
            return w
    return LANE  # unreachable: main_elems is a multiple of LANE


def _pick_tile_rows(rows, width, n, itemsize):
    """Largest row-tile that keeps the double-buffered footprint in budget."""
    bytes_per_row = width * itemsize
    cap = _VMEM_STREAM_BUDGET_BYTES // (2 * (n + 2) * bytes_per_row)
    cap = max(SUBLANE, (cap // SUBLANE) * SUBLANE)

    if rows <= cap:
        tile = rows            # full-extent block: always layout-legal
    else:
        tile = cap             # multiple of 8

    # Ensure >= 2 grid steps when there is enough work, so (a) the pipeline
    # can actually overlap DMA with compute and (b) v7x's two TensorCores
    # both get a share of the "parallel" grid axis.
    if rows > 2 * SUBLANE and pl.cdiv(rows, tile) < 2:
        half = (rows + 1) // 2
        tile = max(SUBLANE, ((half + SUBLANE - 1) // SUBLANE) * SUBLANE)
    return tile


def olss_forward(t, xT, e_prev, wx, we):
    """Pallas implementation of OLSSSchedulerModel.forward."""
    n = len(e_prev)
    assert t - n + 1 == 0, "t must equal len(e_prev) - 1"

    orig_shape = xT.shape
    orig_dtype = xT.dtype
    total = xT.size

    # Scalar weights for this timestep: [wx[t], we[t,0], ..., we[t,n-1]].
    weights = jnp.concatenate([wx[t][None], we[t, :n]], axis=0).astype(jnp.float32)

    x_flat = xT.reshape(-1)
    e_flat = [e.reshape(-1) for e in e_prev]

    main = (total // LANE) * LANE
    if main == 0:
        # Degenerate tiny input: plain JAX.
        out = x_flat.astype(jnp.float32) * weights[0]
        for i, e in enumerate(e_flat):
            out = out + e.astype(jnp.float32) * weights[i + 1]
        return out.astype(orig_dtype).reshape(orig_shape)

    width = _pick_width(main)
    rows = main // width
    itemsize = max([xT.dtype.itemsize] + [e.dtype.itemsize for e in e_prev])
    tile_r = _pick_tile_rows(rows, width, n, itemsize)
    grid = (pl.cdiv(rows, tile_r),)

    block = pl.BlockSpec((tile_r, width), lambda i: (i, 0))

    if main == total:
        x_main = x_flat.reshape(rows, width)
        e_main = [e.reshape(rows, width) for e in e_flat]
    else:
        x_main = x_flat[:main].reshape(rows, width)
        e_main = [e[:main].reshape(rows, width) for e in e_flat]

    out_main = pl.pallas_call(
        _make_kernel(n),
        out_shape=jax.ShapeDtypeStruct((rows, width), orig_dtype),
        grid=grid,
        in_specs=[pl.BlockSpec(memory_space=pltpu.MemorySpace.SMEM)]  # weights
                 + [block] * (n + 1),                                  # xT + e_prev
        out_specs=block,
        compiler_params=pltpu.CompilerParams(
            dimension_semantics=("parallel",),
            vmem_limit_bytes=_VMEM_LIMIT_BYTES,
        ),
    )(weights, x_main, *e_main)

    out_flat = out_main.reshape(-1)
    if main != total:
        # Tail (< 128 elements) handled with a tiny plain-JAX epilogue.
        tail = x_flat[main:].astype(jnp.float32) * weights[0]
        for i, e in enumerate(e_flat):
            tail = tail + e[main:].astype(jnp.float32) * weights[i + 1]
        out_flat = jnp.concatenate([out_flat, tail.astype(orig_dtype)], axis=0)

    return out_flat.reshape(orig_shape)


if __name__ == "__main__":
    key = jax.random.PRNGKey(0)
    k_wx, k_we, k_x, k_e = jax.random.split(key, 4)

    # Synthetic, deterministic parameters.
    T = 8                       # number of scheduler steps
    t = 3                       # current step -> len(e_prev) == 4
    B, C, H, W = 2, 4, 16, 16   # NCHW latent shape

    wx = jax.random.normal(k_wx, (T,), dtype=jnp.float32)
    we = jax.random.normal(k_we, (T, T), dtype=jnp.float32)

    xT = jax.random.normal(k_x, (B, C, H, W), dtype=jnp.float32)
    e_keys = jax.random.split(k_e, t + 1)
    e_prev = [jax.random.normal(k, (B, C, H, W), dtype=jnp.float32)
              for k in e_keys]

    out = olss_forward(t, xT, e_prev, wx, we)
    out = jax.block_until_ready(out)

    # Pure-JAX reference check.
    ref = xT * wx[t]
    for i, e in enumerate(e_prev):
        ref = ref + e * we[t, i]
    ref = ref.astype(xT.dtype)

    assert out.shape == xT.shape and out.dtype == xT.dtype
    assert jnp.allclose(out, ref, atol=1e-5, rtol=1e-5), "mismatch vs reference"

    print("KERNEL_OK")
</pallas_src>

<mosaic_0001>
module attributes {stable_mosaic.version = 11 : i64} {
  func.func @kernel(%arg0: i32, %arg1: memref<5xf32, #tpu.memory_space<smem>>, %arg2: memref<2x1024xf32, #tpu.memory_space<vmem>>, %arg3: memref<2x1024xf32, #tpu.memory_space<vmem>>, %arg4: memref<2x1024xf32, #tpu.memory_space<vmem>>, %arg5: memref<2x1024xf32, #tpu.memory_space<vmem>>, %arg6: memref<2x1024xf32, #tpu.memory_space<vmem>>, %arg7: memref<2x1024xf32, #tpu.memory_space<vmem>>) attributes {dimension_semantics = [#tpu.dimension_semantics<parallel>], iteration_bounds = array<i64: 1>, scalar_prefetch = 0 : i64, scratch_operands = 0 : i64, tpu.core_type = #tpu.core_type<tc>, window_params = [{transform_indices = @transform_0, window_bounds = array<i64: 5>}, {transform_indices = @transform_1, window_bounds = array<i64: 2, 1024>}, {transform_indices = @transform_2, window_bounds = array<i64: 2, 1024>}, {transform_indices = @transform_3, window_bounds = array<i64: 2, 1024>}, {transform_indices = @transform_4, window_bounds = array<i64: 2, 1024>}, {transform_indices = @transform_5, window_bounds = array<i64: 2, 1024>}, {transform_indices = @transform_6, window_bounds = array<i64: 2, 1024>}]} {
    %c0 = arith.constant 0 : index
    %c0_0 = arith.constant 0 : index
    %0 = vector.load %arg2[%c0, %c0_0] : memref<2x1024xf32, #tpu.memory_space<vmem>>, vector<2x1024xf32>
    %c0_1 = arith.constant 0 : index
    %1 = memref.load %arg1[%c0_1] : memref<5xf32, #tpu.memory_space<smem>>
    %2 = vector.broadcast %1 : f32 to vector<2x1024xf32>
    %3 = arith.mulf %0, %2 : vector<2x1024xf32>
    %c0_2 = arith.constant 0 : index
    %c0_3 = arith.constant 0 : index
    %4 = vector.load %arg3[%c0_2, %c0_3] : memref<2x1024xf32, #tpu.memory_space<vmem>>, vector<2x1024xf32>
    %c1 = arith.constant 1 : index
    %5 = memref.load %arg1[%c1] : memref<5xf32, #tpu.memory_space<smem>>
    %6 = vector.broadcast %5 : f32 to vector<2x1024xf32>
    %7 = arith.mulf %4, %6 : vector<2x1024xf32>
    %8 = arith.addf %3, %7 : vector<2x1024xf32>
    %c0_4 = arith.constant 0 : index
    %c0_5 = arith.constant 0 : index
    %9 = vector.load %arg4[%c0_4, %c0_5] : memref<2x1024xf32, #tpu.memory_space<vmem>>, vector<2x1024xf32>
    %c2 = arith.constant 2 : index
    %10 = memref.load %arg1[%c2] : memref<5xf32, #tpu.memory_space<smem>>
    %11 = vector.broadcast %10 : f32 to vector<2x1024xf32>
    %12 = arith.mulf %9, %11 : vector<2x1024xf32>
    %13 = arith.addf %8, %12 : vector<2x1024xf32>
    %c0_6 = arith.constant 0 : index
    %c0_7 = arith.constant 0 : index
    %14 = vector.load %arg5[%c0_6, %c0_7] : memref<2x1024xf32, #tpu.memory_space<vmem>>, vector<2x1024xf32>
    %c3 = arith.constant 3 : index
    %15 = memref.load %arg1[%c3] : memref<5xf32, #tpu.memory_space<smem>>
    %16 = vector.broadcast %15 : f32 to vector<2x1024xf32>
    %17 = arith.mulf %14, %16 : vector<2x1024xf32>
    %18 = arith.addf %13, %17 : vector<2x1024xf32>
    %c0_8 = arith.constant 0 : index
    %c0_9 = arith.constant 0 : index
    %19 = vector.load %arg6[%c0_8, %c0_9] : memref<2x1024xf32, #tpu.memory_space<vmem>>, vector<2x1024xf32>
    %c4 = arith.constant 4 : index
    %20 = memref.load %arg1[%c4] : memref<5xf32, #tpu.memory_space<smem>>
    %21 = vector.broadcast %20 : f32 to vector<2x1024xf32>
    %22 = arith.mulf %19, %21 : vector<2x1024xf32>
    %23 = arith.addf %18, %22 : vector<2x1024xf32>
    %c0_10 = arith.constant 0 : index
    %c0_11 = arith.constant 0 : index
    %24 = vector.load %arg7[%c0_10, %c0_11] : memref<2x1024xf32, #tpu.memory_space<vmem>>, vector<2x1024xf32>
    tpu.vector_store %arg7[%c0_10, %c0_11], %23 {strides = array<i32>} : memref<2x1024xf32, #tpu.memory_space<vmem>>, vector<2x1024xf32>,
    return
  }
  func.func @transform_0(%arg0: i32) -> i32 {
    %c0_i32 = arith.constant 0 : i32
    %c0_i32_0 = arith.constant 0 : i32
    return %c0_i32 : i32
  }
  func.func @transform_1(%arg0: i32) -> (i32, i32) {
    %c0_i32 = arith.constant 0 : i32
    %c0_i32_0 = arith.constant 0 : i32
    return %arg0, %c0_i32 : i32, i32
  }
  func.func @transform_2(%arg0: i32) -> (i32, i32) {
    %c0_i32 = arith.constant 0 : i32
    %c0_i32_0 = arith.constant 0 : i32
    return %arg0, %c0_i32 : i32, i32
  }
  func.func @transform_3(%arg0: i32) -> (i32, i32) {
    %c0_i32 = arith.constant 0 : i32
    %c0_i32_0 = arith.constant 0 : i32
    return %arg0, %c0_i32 : i32, i32
  }
  func.func @transform_4(%arg0: i32) -> (i32, i32) {
    %c0_i32 = arith.constant 0 : i32
    %c0_i32_0 = arith.constant 0 : i32
    return %arg0, %c0_i32 : i32, i32
  }
  func.func @transform_5(%arg0: i32) -> (i32, i32) {
    %c0_i32 = arith.constant 0 : i32
    %c0_i32_0 = arith.constant 0 : i32
    return %arg0, %c0_i32 : i32, i32
  }
  func.func @transform_6(%arg0: i32) -> (i32, i32) {
    %c0_i32 = arith.constant 0 : i32
    %c0_i32_0 = arith.constant 0 : i32
    return %arg0, %c0_i32 : i32, i32
  }
}

</mosaic_0001>

<llo_original>
// kernel: tpu_custom_call.1
$region0: #{tpu_custom_call.1}
  #allocation0 [shape = 'u32[]', space=smem, size = 0x4, offset = 0x4, fixed_abs, tag = 'smem constant byte address 0x4 - core index']
  #allocation1 [shape = 'u32[144,128]{1,0:T(1,128)}', space=vmem, size = 0x12000, scoped, tag = 'internal scratch']
  %s0 = inlined_call_operand.hbm [shape: f32[5], index: 0, kind: input, shape index: {}]
  %s1 = inlined_call_operand.hbm [shape: f32[2,1024], index: 1, kind: input, shape index: {}]
  %s2 = inlined_call_operand.hbm [shape: f32[2,1024], index: 2, kind: input, shape index: {}]
  %s3 = inlined_call_operand.hbm [shape: f32[2,1024], index: 3, kind: input, shape index: {}]
  %s4 = inlined_call_operand.hbm [shape: f32[2,1024], index: 4, kind: input, shape index: {}]
  %s5 = inlined_call_operand.vmem [shape: f32[2,1024], index: 5, kind: input, shape index: {}]
  %s6 = inlined_call_operand.hbm [shape: f32[2,1024], index: 6, kind: output, shape index: {}]
  %s7 = sld [smem:[#allocation0]]
  $region54: #{tpu_custom_call.1} parent=0
    _
  %s9 = ssub.s32 1, %s7
  %s10 = scalar_select 0, %s9, %s7
  $region1: #{tpu_custom_call.1} parent=0
    #allocation2 [shape = 'u8[512]{0}', space=smem, size = 0x200, scoped, tag = 'input window, operand 0, single buffered']
    #allocation3 [shape = 's32[1]{0}', space=sflag, size = 0x4, scoped, tag = 'scoped memory for tpu_custom_call.1']
    #allocation4 [shape = 's32[1]{0}', space=sflag, size = 0x4, scoped, tag = 'scoped memory for tpu_custom_call.1']
    #allocation5 [shape = 's32[1]{0}', space=sflag, size = 0x4, scoped, tag = 'scoped memory for tpu_custom_call.1']
    #allocation6 [shape = 'u8[8192]{0}', space=vmem, size = 0x2000, scoped, tag = 'input window, operand 1, single buffered']
    #allocation7 [shape = 'u8[8192]{0}', space=vmem, size = 0x2000, scoped, tag = 'input window, operand 2, single buffered']
    #allocation8 [shape = 's32[1]{0}', space=sflag, size = 0x4, scoped, tag = 'scoped memory for tpu_custom_call.1']
    #allocation9 [shape = 'u8[8192]{0}', space=vmem, size = 0x2000, scoped, tag = 'input window, operand 3, single buffered']
    #allocation10 [shape = 'u8[8192]{0}', space=vmem, size = 0x2000, scoped, tag = 'input window, operand 4, single buffered']
    #allocation11 [shape = 's32[1]{0}', space=sflag, size = 0x4, scoped, tag = 'scoped memory for tpu_custom_call.1']
    #allocation12 [shape = 'u8[8192]{0}', space=vmem, size = 0x2000, scoped, tag = 'output window, operand 0, single buffered']
    %11 = vsyncpa [#allocation5], 0
    %12 = vsyncpa [#allocation3], 0
    %13 = vsyncpa [#allocation8], 0
    %14 = vsyncpa [#allocation11], 0
    %15 = vsyncpa [#allocation4], 0
    // Predicated region
    $region2: #{tpu_custom_call.1} parent=1 // pred_check
      _
    $region3: #{tpu_custom_call.1} parent=1 // pred_check_branch
      %17 = sbr.rel (0) target = $region5
    $region4: #{tpu_custom_call.1} parent=1 // pred_region
      %s19 = ssub.s32 16, 16
      %20 = vsyncadd [#allocation5], %s19
      %23 = dma.hbm_to_smem %s0, 16, [#allocation2], [#allocation5]
    $region5: #{tpu_custom_call.1} parent=1 // pred_fallthru
      _
    // Predicated region
    $region6: #{tpu_custom_call.1} parent=1 // pred_check
      _
    $region7: #{tpu_custom_call.1} parent=1 // pred_check_branch
      %25 = sbr.rel (0) target = $region9
    $region8: #{tpu_custom_call.1} parent=1 // pred_region
      %s27 = ssub.s32 256, 256
      %28 = vsyncadd [#allocation3], %s27
      %s30 = sshll.u32 [#allocation6], 4
      %s31 = int_to_ptr.vmem [resolvable:$true] %s30
      %33 = dma.hbm_to_vmem [thread:$0]  %s1, 256, %s31, [#allocation3]
    $region9: #{tpu_custom_call.1} parent=1 // pred_fallthru
      _
    // Predicated region
    $region10: #{tpu_custom_call.1} parent=1 // pred_check
      _
    $region11: #{tpu_custom_call.1} parent=1 // pred_check_branch
      %35 = sbr.rel (0) target = $region13
    $region12: #{tpu_custom_call.1} parent=1 // pred_region
      %s37 = ssub.s32 256, 256
      %38 = vsyncadd [#allocation8], %s37
      %s40 = sshll.u32 [#allocation7], 4
      %s41 = int_to_ptr.vmem [resolvable:$true] %s40
      %43 = dma.hbm_to_vmem [thread:$0]  %s2, 256, %s41, [#allocation8]
    $region13: #{tpu_custom_call.1} parent=1 // pred_fallthru
      _
    // Predicated region
    $region14: #{tpu_custom_call.1} parent=1 // pred_check
      _
    $region15: #{tpu_custom_call.1} parent=1 // pred_check_branch
      %45 = sbr.rel (0) target = $region17
    $region16: #{tpu_custom_call.1} parent=1 // pred_region
      %s47 = ssub.s32 256, 256
      %48 = vsyncadd [#allocation8], %s47
      %s50 = sshll.u32 [#allocation9], 4
      %s51 = int_to_ptr.vmem [resolvable:$true] %s50
      %53 = dma.hbm_to_vmem [thread:$0]  %s3, 256, %s51, [#allocation8]
    $region17: #{tpu_custom_call.1} parent=1 // pred_fallthru
      _
    // Predicated region
    $region18: #{tpu_custom_call.1} parent=1 // pred_check
      _
    $region19: #{tpu_custom_call.1} parent=1 // pred_check_branch
      %55 = sbr.rel (0) target = $region21
    $region20: #{tpu_custom_call.1} parent=1 // pred_region
      %s57 = ssub.s32 256, 256
      %58 = vsyncadd [#allocation11], %s57
      %s60 = sshll.u32 [#allocation10], 4
      %s61 = int_to_ptr.vmem [resolvable:$true] %s60
      %63 = dma.hbm_to_vmem [thread:$0]  %s4, 256, %s61, [#allocation11]
    $region21: #{tpu_custom_call.1} parent=1 // pred_fallthru
      _
    // Predicated region
    $region22: #{tpu_custom_call.1} parent=1 // pred_check
      _
    $region23: #{tpu_custom_call.1} parent=1 // pred_check_branch
      %65 = sbr.rel (0) target = $region25
    $region24: #{tpu_custom_call.1} parent=1 // pred_region
      _
    $region25: #{tpu_custom_call.1} parent=1 // pred_fallthru
      _
    // Predicated region
    $region26: #{tpu_custom_call.1} parent=1 // pred_check
      _
    $region27: #{tpu_custom_call.1} parent=1 // pred_check_branch
      %67 = sbr.rel (0) target = $region29
    $region28: #{tpu_custom_call.1} parent=1 // pred_region
      %68 = dma.done [#allocation5], 16
    $region29: #{tpu_custom_call.1} parent=1 // pred_fallthru
      _
    // Predicated region
    $region30: #{tpu_custom_call.1} parent=1 // pred_check
      _
    $region31: #{tpu_custom_call.1} parent=1 // pred_check_branch
      %70 = sbr.rel (0) target = $region33
    $region32: #{tpu_custom_call.1} parent=1 // pred_region
      %71 = dma.done [#allocation3], 256
    $region33: #{tpu_custom_call.1} parent=1 // pred_fallthru
      _
    // Predicated region
    $region34: #{tpu_custom_call.1} parent=1 // pred_check
      _
    $region35: #{tpu_custom_call.1} parent=1 // pred_check_branch
      %73 = sbr.rel (0) target = $region37
    $region36: #{tpu_custom_call.1} parent=1 // pred_region
      %74 = dma.done [#allocation8], 256
    $region37: #{tpu_custom_call.1} parent=1 // pred_fallthru
      _
    // Predicated region
    $region38: #{tpu_custom_call.1} parent=1 // pred_check
      _
    $region39: #{tpu_custom_call.1} parent=1 // pred_check_branch
      %76 = sbr.rel (0) target = $region41
    $region40: #{tpu_custom_call.1} parent=1 // pred_region
      %77 = dma.done [#allocation8], 256
    $region41: #{tpu_custom_call.1} parent=1 // pred_fallthru
      _
    // Predicated region
    $region42: #{tpu_custom_call.1} parent=1 // pred_check
      _
    $region43: #{tpu_custom_call.1} parent=1 // pred_check_branch
      %79 = sbr.rel (0) target = $region45
    $region44: #{tpu_custom_call.1} parent=1 // pred_region
      %80 = dma.done [#allocation11], 256
    $region45: #{tpu_custom_call.1} parent=1 // pred_fallthru
      _
    %81 = sfence
    %v82 = vld [vmem:[#allocation6] sm:$0xff]
    %v83 = vld [vmem:[#allocation6 + $0x8] sm:$0xff]
    %s84 = sld [smem:[#allocation2]]
    %v85 = vstv %s84
    %v86 = vmul.f32 %v82, %v85
    %v87 = vmul.f32 %v83, %v85
    %v88 = vld [vmem:[#allocation7] sm:$0xff]
    %v89 = vld [vmem:[#allocation7 + $0x8] sm:$0xff]
    %s90 = sld [smem:[#allocation2 + $0x1]]
    %v91 = vstv %s90
    %v92 = vmul.f32 %v88, %v91
    %v93 = vmul.f32 %v89, %v91
    %v94 = vadd.f32 %v86, %v92
    %v95 = vadd.f32 %v87, %v93
    %v96 = vld [vmem:[#allocation9] sm:$0xff]
    %v97 = vld [vmem:[#allocation9 + $0x8] sm:$0xff]
    %s98 = sld [smem:[#allocation2 + $0x2]]
    %v99 = vstv %s98
    %v100 = vmul.f32 %v96, %v99
    %v101 = vmul.f32 %v97, %v99
    %v102 = vadd.f32 %v94, %v100
    %v103 = vadd.f32 %v95, %v101
    %v104 = vld [vmem:[#allocation10] sm:$0xff]
    %v105 = vld [vmem:[#allocation10 + $0x8] sm:$0xff]
    %s106 = sld [smem:[#allocation2 + $0x3]]
    %v107 = vstv %s106
    %v108 = vmul.f32 %v104, %v107
    %v109 = vmul.f32 %v105, %v107
    %v110 = vadd.f32 %v102, %v108
    %v111 = vadd.f32 %v103, %v109
    %v112 = vld [vmem:[%s5] sm:$0xff]
    %v113 = vld [vmem:[%s5 + $0x8] sm:$0xff]
    %s114 = sld [smem:[#allocation2 + $0x4]]
    %v115 = vstv %s114
    %v116 = vmul.f32 %v112, %v115
    %v117 = vmul.f32 %v113, %v115
    %v118 = vadd.f32 %v110, %v116
    %v119 = vadd.f32 %v111, %v117
    %120 = vst [vmem:[#allocation12] sm:$0xff] %v118
    %121 = vst [vmem:[#allocation12 + $0x8] sm:$0xff] %v119
    // Predicated region
    $region46: #{tpu_custom_call.1} parent=1 // pred_check
      _
    $region47: #{tpu_custom_call.1} parent=1 // pred_check_branch
      %123 = sbr.rel (0) target = $region49
    $region48: #{tpu_custom_call.1} parent=1 // pred_region
      %s125 = ssub.s32 256, 256
      %126 = vsyncadd [#allocation4], %s125
      %s128 = sshll.u32 [#allocation12], 4
      %s129 = int_to_ptr.vmem [resolvable:$true] %s128
      %131 = dma.vmem_to_hbm [thread:$0]  %s129, 256, %s6, [#allocation4]
    $region49: #{tpu_custom_call.1} parent=1 // pred_fallthru
      _
    // Predicated region
    $region50: #{tpu_custom_call.1} parent=1 // pred_check
      _
    $region51: #{tpu_custom_call.1} parent=1 // pred_check_branch
      %133 = sbr.rel (0) target = $region53
    $region52: #{tpu_custom_call.1} parent=1 // pred_region
      %134 = dma.done [#allocation4], 256
    $region53: #{tpu_custom_call.1} parent=1 // pred_fallthru
      _
    %135 = vsyncpa [#allocation3], 1
    %136 = vsyncpa [#allocation8], 1
    %137 = vsyncpa [#allocation11], 1
    %138 = vsyncpa [#allocation4], 1
    %139 = vsyncpa [#allocation5], 1

</llo_original>
